<compile_context>
chip_gen: v7x
topology: tpu7x:2x2x1
jax: 0.10.0
libtpu: 0.0.40
codegen_flags: <defaults>
</compile_context>

<pallas_src>
import functools

import jax
import jax.numpy as jnp
from jax.experimental import pallas as pl
from jax.experimental.pallas import tpu as pltpu


def _down_kernel(s_ref, w_ref, b_ref, o_ref, *, wh):
    """One (batch, row-chunk) grid step.

    s_ref: (1, 1, F, (TH+1)*Wh + 1)  space-to-depth rows of this chunk + halo,
                                      lane index = t*Wh + j.
    w_ref: (4, Cout, F)               per-tap weights, tap = 2*dh + dw.
    b_ref: (Cout, 1)                  bias (f32).
    o_ref: (1, 1, Cout, TH*Wh)        chunk output, lane index = t*Wh + j
                                      (column j == Wh-1 is garbage, dropped in
                                      the wrapper).
    """
    nlanes = o_ref.shape[-1]                       # TH * Wh

    # Four chunk-wide MXU matmuls (K = F, N = TH*Wh), f32 accumulation.
    # Tap (dh, dw) reads the resident block at static lane offset dh*Wh + dw.
    acc = jnp.dot(w_ref[0], s_ref[0, 0, :, 0:nlanes],
                  preferred_element_type=jnp.float32)
    acc = acc + jnp.dot(w_ref[1], s_ref[0, 0, :, 1:1 + nlanes],
                        preferred_element_type=jnp.float32)
    acc = acc + jnp.dot(w_ref[2], s_ref[0, 0, :, wh:wh + nlanes],
                        preferred_element_type=jnp.float32)
    acc = acc + jnp.dot(w_ref[3], s_ref[0, 0, :, wh + 1:wh + 1 + nlanes],
                        preferred_element_type=jnp.float32)
    o_ref[0, 0] = (acc + b_ref[...]).astype(o_ref.dtype)


def _pick_row_tile(ho, wh, f, cout, in_isz, out_isz, n_batch,
                   budget_bytes=28 * 1024 * 1024):
    """Largest TH whose per-step VMEM footprint (incl. double buffering and the
    shifted tap temporaries) fits the budget; keeps >=2 grid steps when possible
    so a v7x chip's two TensorCores both get work."""
    def footprint(th):
        lanes = th * wh
        in_blk = f * ((th + 1) * wh + 1) * in_isz
        out_blk = cout * lanes * out_isz
        taps = 3 * f * lanes * in_isz          # shifted tap slices
        acc = cout * lanes * 4                 # f32 accumulator
        wts = 4 * cout * f * in_isz
        return 2 * (in_blk + out_blk) + taps + acc + 2 * wts

    th = 1
    for cand in range(1, ho + 1):
        if footprint(cand) <= budget_bytes:
            th = cand
    cdiv = lambda a, b: -(-a // b)
    if n_batch * cdiv(ho, th) < 2 and ho >= 2:
        th = cdiv(ho, 2)                       # ensure >=2 grid steps (megacore)
    return th


def downsample_forward(x, weight, bias):
    """Conv2d(Cin, Cout, kernel_size=4, stride=2, padding=1) forward.

    x: (N, C, H, W); weight: (Cout, C, 4, 4); bias: (Cout,).
    Returns (N, Cout, H//2, W//2)  (floor, matching PyTorch for odd H/W too).
    """
    n, c, h, w = x.shape
    cout = weight.shape[0]
    ho, wo = h // 2, w // 2
    wh = wo + 1
    f = 4 * c

    in_dt = x.dtype
    isz = jnp.dtype(in_dt).itemsize

    th = _pick_row_tile(ho, wh, f, cout, isz, isz, n)
    rc = -(-ho // th)                          # ceil-div; TH need not divide Ho
    ho_pad = rc * th

    # ---- ~1x relayout: pad + space-to-depth + overlapping row chunks --------
    # SC[n, r, (ph*2+pw)*C + ch, t*Wh + j] = xpad[n, ch, 2*(r*TH+t) + ph, 2*j + pw]
    bottom = max(0, 2 * (ho_pad + 1) - (h + 2))
    right = max(0, 2 * wh - (w + 2))
    xp = jnp.pad(x, ((0, 0), (0, 0), (1, 1 + bottom), (1, 1 + right)))
    xp = xp[:, :, :2 * (ho_pad + 1), :2 * wh]
    sp = xp.reshape(n, c, ho_pad + 1, 2, wh, 2)              # (n,c,i,ph,j,pw)
    body = sp[:, :, :ho_pad].reshape(n, c, rc, th, 2, wh, 2)
    halo = sp[:, :, th::th][:, :, :, None]                   # rows TH,2TH,...,RC*TH
    chunks = jnp.concatenate([body, halo], axis=3)           # (n,c,rc,th+1,2,wh,2)
    sc = jnp.transpose(chunks, (0, 2, 4, 6, 1, 3, 5))        # (n,rc,ph,pw,c,t,j)
    sc = sc.reshape(n, rc, f, (th + 1) * wh)
    sc = jnp.pad(sc, ((0, 0), (0, 0), (0, 0), (0, 1)))       # +1 lane for the (1,1) tap
    lanes_in = (th + 1) * wh + 1
    nlanes = th * wh

    # weight (Cout, C, 4, 4) -> (tap = 2*dh+dw, Cout, F) with F ordered (ph, pw, c)
    wt = weight.reshape(cout, c, 2, 2, 2, 2)                 # (co,ch,dh,ph,dw,pw)
    wt = jnp.transpose(wt, (2, 4, 0, 3, 5, 1))               # (dh,dw,co,ph,pw,ch)
    wt = wt.reshape(4, cout, f).astype(in_dt)
    brow = bias.astype(jnp.float32).reshape(cout, 1)

    flops = 2 * n * rc * cout * nlanes * 4 * f
    bytes_accessed = (sc.size + wt.size + n * rc * cout * nlanes) * isz + 4 * cout

    out = pl.pallas_call(
        functools.partial(_down_kernel, wh=wh),
        out_shape=jax.ShapeDtypeStruct((n, rc, cout, nlanes), in_dt),
        grid=(n, rc),
        in_specs=[
            # chunk slab (trailing block dims == full array dims -> safe tiling)
            pl.BlockSpec((1, 1, f, lanes_in), lambda b, r: (b, r, 0, 0)),
            # resident per-tap weights and bias
            pl.BlockSpec((4, cout, f), lambda b, r: (0, 0, 0)),
            pl.BlockSpec((cout, 1), lambda b, r: (0, 0)),
        ],
        out_specs=pl.BlockSpec((1, 1, cout, nlanes), lambda b, r: (b, r, 0, 0)),
        compiler_params=pltpu.CompilerParams(
            dimension_semantics=("parallel", "parallel"),
            vmem_limit_bytes=64 * 1024 * 1024),
        cost_estimate=pl.CostEstimate(
            flops=flops, transcendentals=0, bytes_accessed=bytes_accessed),
    )(sc, wt, brow)

    # lane-flattened chunk output -> NCHW; drop garbage column / padded rows.
    out = out.reshape(n, rc, cout, th, wh)[:, :, :, :, :wo]
    out = jnp.transpose(out, (0, 2, 1, 3, 4)).reshape(n, cout, ho_pad, wo)
    return out[:, :, :ho, :]
    # TODO(synk): extremely wide layers (F * Wh * itemsize >> VMEM) would need an
    # additional width/feature split; not needed for typical autoencoder shapes.


if __name__ == "__main__":
    key = jax.random.PRNGKey(0)
    kx, kw_, kb = jax.random.split(key, 3)

    N, C, H, W = 2, 4, 16, 16
    x = jax.random.normal(kx, (N, C, H, W), dtype=jnp.float32)
    # Deterministic synthetic parameters with PyTorch Conv2d shapes.
    weight = jax.random.normal(kw_, (C, C, 4, 4), dtype=jnp.float32) * 0.1
    bias = jax.random.normal(kb, (C,), dtype=jnp.float32) * 0.1

    fwd = jax.jit(downsample_forward)
    out = jax.block_until_ready(fwd(x, weight, bias))

    # Reference check against XLA's conv (same semantics as nn.Conv2d).
    ref = jax.lax.conv_general_dilated(
        x, weight, window_strides=(2, 2), padding=((1, 1), (1, 1)),
        dimension_numbers=("NCHW", "OIHW", "NCHW"),
    ) + bias.reshape(1, C, 1, 1)
    assert out.shape == (N, C, H // 2, W // 2)
    assert jnp.allclose(out, ref, atol=1e-4, rtol=1e-4)

    print("KERNEL_OK")
</pallas_src>

<mosaic_0001>
module attributes {stable_mosaic.version = 11 : i64} {
  func.func @_down_kernel(%arg0: i32, %arg1: i32, %arg2: memref<1x1x16x82xf32, #tpu.memory_space<vmem>>, %arg3: memref<4x4x16xf32, #tpu.memory_space<vmem>>, %arg4: memref<4x1xf32, #tpu.memory_space<vmem>>, %arg5: memref<1x1x4x72xf32, #tpu.memory_space<vmem>>) attributes {dimension_semantics = [#tpu.dimension_semantics<parallel>, #tpu.dimension_semantics<parallel>], iteration_bounds = array<i64: 2, 1>, scalar_prefetch = 0 : i64, scratch_operands = 0 : i64, tpu.core_type = #tpu.core_type<tc>, window_params = [{transform_indices = @transform_0, window_bounds = array<i64: 1, 1, 16, 82>}, {pipeline_mode = #tpu.pipeline_mode<synchronous>, transform_indices = @transform_1, window_bounds = array<i64: 4, 4, 16>}, {pipeline_mode = #tpu.pipeline_mode<synchronous>, transform_indices = @transform_2, window_bounds = array<i64: 4, 1>}, {transform_indices = @transform_3, window_bounds = array<i64: 1, 1, 4, 72>}]} {
    %c0 = arith.constant 0 : index
    %c0_0 = arith.constant 0 : index
    %c0_1 = arith.constant 0 : index
    %0 = vector.load %arg3[%c0, %c0_0, %c0_1] : memref<4x4x16xf32, #tpu.memory_space<vmem>>, vector<1x4x16xf32>
    %1 = vector.shape_cast %0 : vector<1x4x16xf32> to vector<4x16xf32>
    %c0_2 = arith.constant 0 : index
    %c0_3 = arith.constant 0 : index
    %c0_4 = arith.constant 0 : index
    %c0_5 = arith.constant 0 : index
    %2 = vector.load %arg2[%c0_2, %c0_3, %c0_4, %c0_5] : memref<1x1x16x82xf32, #tpu.memory_space<vmem>>, vector<1x1x16x72xf32>
    %3 = vector.shape_cast %2 : vector<1x1x16x72xf32> to vector<16x72xf32>
    %cst = arith.constant dense<0.000000e+00> : vector<4x72xf32>
    %4 = tpu.matmul %1, %3, %cst {dimension_numbers = #tpu.dot_dimension_numbers<[1], [0], [0], [1], [0, 0, 1, 1], [], []>} : vector<4x16xf32>, vector<16x72xf32>, vector<4x72xf32> -> vector<4x72xf32>
    %c1 = arith.constant 1 : index
    %c0_6 = arith.constant 0 : index
    %c0_7 = arith.constant 0 : index
    %5 = vector.load %arg3[%c1, %c0_6, %c0_7] : memref<4x4x16xf32, #tpu.memory_space<vmem>>, vector<1x4x16xf32>
    %6 = vector.shape_cast %5 : vector<1x4x16xf32> to vector<4x16xf32>
    %c0_8 = arith.constant 0 : index
    %c0_9 = arith.constant 0 : index
    %c0_10 = arith.constant 0 : index
    %c1_11 = arith.constant 1 : index
    %7 = vector.load %arg2[%c0_8, %c0_9, %c0_10, %c1_11] : memref<1x1x16x82xf32, #tpu.memory_space<vmem>>, vector<1x1x16x72xf32>
    %8 = vector.shape_cast %7 : vector<1x1x16x72xf32> to vector<16x72xf32>
    %cst_12 = arith.constant dense<0.000000e+00> : vector<4x72xf32>
    %9 = tpu.matmul %6, %8, %cst_12 {dimension_numbers = #tpu.dot_dimension_numbers<[1], [0], [0], [1], [0, 0, 1, 1], [], []>} : vector<4x16xf32>, vector<16x72xf32>, vector<4x72xf32> -> vector<4x72xf32>
    %10 = arith.addf %4, %9 : vector<4x72xf32>
    %c2 = arith.constant 2 : index
    %c0_13 = arith.constant 0 : index
    %c0_14 = arith.constant 0 : index
    %11 = vector.load %arg3[%c2, %c0_13, %c0_14] : memref<4x4x16xf32, #tpu.memory_space<vmem>>, vector<1x4x16xf32>
    %12 = vector.shape_cast %11 : vector<1x4x16xf32> to vector<4x16xf32>
    %c0_15 = arith.constant 0 : index
    %c0_16 = arith.constant 0 : index
    %c0_17 = arith.constant 0 : index
    %c9 = arith.constant 9 : index
    %13 = vector.load %arg2[%c0_15, %c0_16, %c0_17, %c9] : memref<1x1x16x82xf32, #tpu.memory_space<vmem>>, vector<1x1x16x72xf32>
    %14 = vector.shape_cast %13 : vector<1x1x16x72xf32> to vector<16x72xf32>
    %cst_18 = arith.constant dense<0.000000e+00> : vector<4x72xf32>
    %15 = tpu.matmul %12, %14, %cst_18 {dimension_numbers = #tpu.dot_dimension_numbers<[1], [0], [0], [1], [0, 0, 1, 1], [], []>} : vector<4x16xf32>, vector<16x72xf32>, vector<4x72xf32> -> vector<4x72xf32>
    %16 = arith.addf %10, %15 : vector<4x72xf32>
    %c3 = arith.constant 3 : index
    %c0_19 = arith.constant 0 : index
    %c0_20 = arith.constant 0 : index
    %17 = vector.load %arg3[%c3, %c0_19, %c0_20] : memref<4x4x16xf32, #tpu.memory_space<vmem>>, vector<1x4x16xf32>
    %18 = vector.shape_cast %17 : vector<1x4x16xf32> to vector<4x16xf32>
    %c0_21 = arith.constant 0 : index
    %c0_22 = arith.constant 0 : index
    %c0_23 = arith.constant 0 : index
    %c10 = arith.constant 10 : index
    %19 = vector.load %arg2[%c0_21, %c0_22, %c0_23, %c10] : memref<1x1x16x82xf32, #tpu.memory_space<vmem>>, vector<1x1x16x72xf32>
    %20 = vector.shape_cast %19 : vector<1x1x16x72xf32> to vector<16x72xf32>
    %cst_24 = arith.constant dense<0.000000e+00> : vector<4x72xf32>
    %21 = tpu.matmul %18, %20, %cst_24 {dimension_numbers = #tpu.dot_dimension_numbers<[1], [0], [0], [1], [0, 0, 1, 1], [], []>} : vector<4x16xf32>, vector<16x72xf32>, vector<4x72xf32> -> vector<4x72xf32>
    %22 = arith.addf %16, %21 : vector<4x72xf32>
    %c0_25 = arith.constant 0 : index
    %c0_26 = arith.constant 0 : index
    %23 = vector.load %arg4[%c0_25, %c0_26] : memref<4x1xf32, #tpu.memory_space<vmem>>, vector<4x1xf32>
    %24 = vector.broadcast %23 : vector<4x1xf32> to vector<4x72xf32>
    %25 = arith.addf %22, %24 : vector<4x72xf32>
    %c0_27 = arith.constant 0 : index
    %c0_28 = arith.constant 0 : index
    %c0_29 = arith.constant 0 : index
    %c0_30 = arith.constant 0 : index
    %26 = vector.load %arg5[%c0_27, %c0_28, %c0_29, %c0_30] : memref<1x1x4x72xf32, #tpu.memory_space<vmem>>, vector<1x1x4x72xf32>
    %27 = vector.shape_cast %26 : vector<1x1x4x72xf32> to vector<4x72xf32>
    %28 = vector.shape_cast %25 : vector<4x72xf32> to vector<1x1x4x72xf32>
    tpu.vector_store %arg5[%c0_27, %c0_28, %c0_29, %c0_30], %28 {strides = array<i32>} : memref<1x1x4x72xf32, #tpu.memory_space<vmem>>, vector<1x1x4x72xf32>,
    return
  }
  func.func @transform_0(%arg0: i32, %arg1: i32) -> (i32, i32, i32, i32) {
    %c0_i32 = arith.constant 0 : i32
    %c0_i32_0 = arith.constant 0 : i32
    %c0_i32_1 = arith.constant 0 : i32
    return %arg0, %arg1, %c0_i32, %c0_i32_0 : i32, i32, i32, i32
  }
  func.func @transform_1(%arg0: i32, %arg1: i32) -> (i32, i32, i32) {
    %c0_i32 = arith.constant 0 : i32
    %c0_i32_0 = arith.constant 0 : i32
    %c0_i32_1 = arith.constant 0 : i32
    %c0_i32_2 = arith.constant 0 : i32
    return %c0_i32, %c0_i32_0, %c0_i32_1 : i32, i32, i32
  }
  func.func @transform_2(%arg0: i32, %arg1: i32) -> (i32, i32) {
    %c0_i32 = arith.constant 0 : i32
    %c0_i32_0 = arith.constant 0 : i32
    %c0_i32_1 = arith.constant 0 : i32
    return %c0_i32, %c0_i32_0 : i32, i32
  }
  func.func @transform_3(%arg0: i32, %arg1: i32) -> (i32, i32, i32, i32) {
    %c0_i32 = arith.constant 0 : i32
    %c0_i32_0 = arith.constant 0 : i32
    %c0_i32_1 = arith.constant 0 : i32
    return %arg0, %arg1, %c0_i32, %c0_i32_0 : i32, i32, i32, i32
  }
}

</mosaic_0001>

<llo_original>
// kernel: downsample_forward.1
$region0: #{downsample_forward.1}
  #allocation0 [shape = 'u32[]', space=smem, size = 0x4, offset = 0x4, fixed_abs, tag = 'smem constant byte address 0x4 - core index']
  #allocation1 [shape = 'u32[144,128]{1,0:T(1,128)}', space=vmem, size = 0x12000, scoped, tag = 'internal scratch']
  %s0 = inlined_call_operand.hbm [shape: f32[2,1,16,82], index: 0, kind: input, shape index: {}]
  %s1 = inlined_call_operand.hbm [shape: f32[4,4,16], index: 1, kind: input, shape index: {}]
  %s2 = inlined_call_operand.hbm [shape: f32[4,1], index: 2, kind: input, shape index: {}]
  %s3 = inlined_call_operand.hbm [shape: f32[2,1,4,72], index: 3, kind: output, shape index: {}]
  %s4 = sld [smem:[#allocation0]]
  $region57: #{downsample_forward.1} parent=0
    _
  %s6 = ssub.s32 1, %s4
  %s7 = scalar_select 0, %s6, %s4
  $region1: #{downsample_forward.1} parent=0
    #allocation2 [shape = 'u8[16384]{0}', space=vmem, size = 0x4000, scoped, tag = 'input window, operand 0']
    #allocation3 [shape = 's32[2]{0}', space=sflag, size = 0x8, scoped, tag = 'scoped memory for downsample_forward.1']
    #allocation4 [shape = 's32[2]{0}', space=sflag, size = 0x8, scoped, tag = 'scoped memory for downsample_forward.1']
    #allocation5 [shape = 'u8[8192]{0}', space=vmem, size = 0x2000, scoped, tag = 'input window, operand 1, single buffered']
    #allocation6 [shape = 's32[1]{0}', space=sflag, size = 0x4, scoped, tag = 'scoped memory for downsample_forward.1']
    #allocation7 [shape = 'u8[2048]{0}', space=vmem, size = 0x800, scoped, tag = 'input window, operand 2, single buffered']
    #allocation8 [shape = 'u8[4096]{0}', space=vmem, size = 0x1000, scoped, tag = 'output window, operand 0']
    %8 = vsyncpa [#allocation3], 0
    %s9 = scalar_lea.sflag [#allocation3], 1
    %10 = vsyncpa %s9, 0
    %11 = vsyncpa [#allocation6], 0
    %12 = vsyncpa [#allocation4], 0
    %s13 = scalar_lea.sflag [#allocation4], 1
    %14 = vsyncpa %s13, 0
    loop: start=0, step=1, limit=4
    $region2: #{downsample_forward.1} parent=1 // loop_pre_header
      _
    $region3: #{downsample_forward.1} parent=1 // loop_header
      %s16 = sphi 0, %s20
      %p17 = scmp.ge.s32.totalorder %s16, 4
      %s23 = sphi 0, %s35
      %s24 = sphi 0, %s31
      %s25 = sphi 0, %s23
      %s26 = sphi 0, %s24
      %s27 = sphi 0, %s25
      %s28 = sphi 0, %s26
      %s40 = sphi 0, %s42
      %s43 = sphi 0, %s40
      %s44 = sphi 0, %s43
      %s60 = sphi 0, %s44
      %s64 = sphi 0, %s64
      %s66 = sphi 0, %s64
      %s67 = sphi 0, %s66
      %s81 = sphi 0, %s67
      %s85 = sphi 0, %s85
      %s87 = sphi 0, %s85
      %s88 = sphi 0, %s87
      %s102 = sphi 0, %s88
      %s110 = sphi 0, %s112
      %s113 = sphi 0, %s110
      %s114 = sphi 0, %s113
      %s130 = sphi 0, %s114
    $region4: #{downsample_forward.1} parent=1 // loop_header_branch
      %19 = sbr.rel (%p17) target = $region8
    $region5: #{downsample_forward.1} parent=1 // loop_body
      %s21 = ssub.s32 %s16, 1
      %s22 = ssub.s32 %s16, 2
      %s29 = sadd.s32 1, %s24
      %p30 = scmp.ge.s32.totalorder %s29, 1
      %s31 = scalar_select %p30, 0, %s29
      %s32 = sadd.s32 1, %s23
      %s33 = scalar_select %p30, %s32, %s23
      %p34 = scmp.ge.s32.totalorder %s33, 2
      %s35 = scalar_select %p34, 0, %s33
      %s36 = ssub.s32 %s23, %s35
      %s37 = ssub.s32 %s24, %s31
      %s38 = sor.u32 %s36, %s37
      %p39 = scmp.eq.s32.totalorder %s38, 0
      %s41 = sadd.s32 %s40, 1
      %s42 = scalar_select %p39, %s40, %s41
      %p45 = pneg %p39
      %p46 = scmp.eq.s32.totalorder %s16, 1
      %p47 = por %p45, %p46
      %p48 = scmp.ne.s32.totalorder %s40, %s43
      %p49 = scmp.eq.s32.totalorder %s16, 0
      %p50 = por %p48, %p49
      %p51 = scmp.ne.s32.totalorder %s40, %s43
      %p52 = scmp.eq.s32.totalorder %s21, 1
      %p53 = por %p51, %p52
      %p54 = scmp.ne.s32.totalorder %s43, %s44
      %p55 = scmp.eq.s32.totalorder %s21, 0
      %p56 = por %p54, %p55
      %p57 = scmp.ne.s32.totalorder %s43, %s44
      %p58 = scmp.eq.s32.totalorder %s22, 1
      %p59 = por %p57, %p58
      %p61 = scmp.ne.s32.totalorder %s44, %s60
      %p62 = scmp.eq.s32.totalorder %s22, 0
      %p63 = por %p61, %p62
      %s65 = sadd.s32 %s64, 1
      %p68 = scmp.eq.s32.totalorder %s16, 1
      %p69 = scmp.ne.s32.totalorder %s64, %s66
      %p70 = scmp.eq.s32.totalorder %s16, 0
      %p71 = por %p69, %p70
      %p72 = scmp.ne.s32.totalorder %s64, %s66
      %p73 = scmp.eq.s32.totalorder %s21, 1
      %p74 = por %p72, %p73
      %p75 = scmp.ne.s32.totalorder %s66, %s67
      %p76 = scmp.eq.s32.totalorder %s21, 0
      %p77 = por %p75, %p76
      %p78 = scmp.ne.s32.totalorder %s66, %s67
      %p79 = scmp.eq.s32.totalorder %s22, 1
      %p80 = por %p78, %p79
      %p82 = scmp.ne.s32.totalorder %s67, %s81
      %p83 = scmp.eq.s32.totalorder %s22, 0
      %p84 = por %p82, %p83
      %s86 = sadd.s32 %s85, 1
      %p89 = scmp.eq.s32.totalorder %s16, 1
      %p90 = scmp.ne.s32.totalorder %s85, %s87
      %p91 = scmp.eq.s32.totalorder %s16, 0
      %p92 = por %p90, %p91
      %p93 = scmp.ne.s32.totalorder %s85, %s87
      %p94 = scmp.eq.s32.totalorder %s21, 1
      %p95 = por %p93, %p94
      %p96 = scmp.ne.s32.totalorder %s87, %s88
      %p97 = scmp.eq.s32.totalorder %s21, 0
      %p98 = por %p96, %p97
      %p99 = scmp.ne.s32.totalorder %s87, %s88
      %p100 = scmp.eq.s32.totalorder %s22, 1
      %p101 = por %p99, %p100
      %p103 = scmp.ne.s32.totalorder %s88, %s102
      %p104 = scmp.eq.s32.totalorder %s22, 0
      %p105 = por %p103, %p104
      %s106 = ssub.s32 %s23, %s35
      %s107 = ssub.s32 %s24, %s31
      %s108 = sor.u32 %s106, %s107
      %p109 = scmp.eq.s32.totalorder %s108, 0
      %s111 = sadd.s32 %s110, 1
      %s112 = scalar_select %p109, %s110, %s111
      %p115 = pneg %p109
      %p116 = scmp.eq.s32.totalorder %s16, 1
      %p117 = por %p115, %p116
      %p118 = scmp.ne.s32.totalorder %s110, %s113
      %p119 = scmp.eq.s32.totalorder %s16, 0
      %p120 = por %p118, %p119
      %p121 = scmp.ne.s32.totalorder %s110, %s113
      %p122 = scmp.eq.s32.totalorder %s21, 1
      %p123 = por %p121, %p122
      %p124 = scmp.ne.s32.totalorder %s113, %s114
      %p125 = scmp.eq.s32.totalorder %s21, 0
      %p126 = por %p124, %p125
      %p127 = scmp.ne.s32.totalorder %s113, %s114
      %p128 = scmp.eq.s32.totalorder %s22, 1
      %p129 = por %p127, %p128
      %p131 = scmp.ne.s32.totalorder %s114, %s130
      %p132 = scmp.eq.s32.totalorder %s22, 0
      %p133 = por %p131, %p132
      %p134 = scmp.le.s32.totalorder 1, %s16
      %p135 = scmp.lt.s32.totalorder %s16, 3
      %p136 = pnand %p134, %p135
      %p137 = pneg %p136
      // Predicated region
      $region9: #{downsample_forward.1} parent=5 // pred_check
        _
      $region10: #{downsample_forward.1} parent=5 // pred_check_branch
        %139 = sbr.rel (%p136) target = $region12
      $region11: #{downsample_forward.1} parent=5 // pred_region
        %s140 = ssub.s32 %s16, 1
        // Predicated region
        $region13: #{downsample_forward.1} parent=11 // pred_check
          %p141 = pneg %p77
        $region14: #{downsample_forward.1} parent=11 // pred_check_branch
          %143 = sbr.rel (%p141) target = $region16
        $region15: #{downsample_forward.1} parent=11 // pred_region
          %s145 = ssub.s32 256, 256
          %146 = vsyncadd [#allocation6], %s145
          %s147 = sshll.u32 [#allocation5], 4
          %s148 = int_to_ptr.vmem [resolvable:$true] %s147
          %153 = dma.hbm_to_vmem [thread:$0]  %s1, 256, %s148, [#allocation6], 64, 64, 4
        $region16: #{downsample_forward.1} parent=11 // pred_fallthru
          _
        // Predicated region
        $region17: #{downsample_forward.1} parent=11 // pred_check
          %p154 = pneg %p98
        $region18: #{downsample_forward.1} parent=11 // pred_check_branch
          %156 = sbr.rel (%p154) target = $region20
        $region19: #{downsample_forward.1} parent=11 // pred_region
          %s158 = ssub.s32 64, 64
          %159 = vsyncadd [#allocation6], %s158
          %s161 = sshll.u32 [#allocation7], 4
          %s162 = int_to_ptr.vmem [resolvable:$true] %s161
          %164 = dma.hbm_to_vmem [thread:$0]  %s2, 64, %s162, [#allocation6]
        $region20: #{downsample_forward.1} parent=11 // pred_fallthru
          _
      $region12: #{downsample_forward.1} parent=5 // pred_fallthru
        _
      %p165 = scmp.lt.s32.totalorder %s16, 2
      // Predicated region
      $region21: #{downsample_forward.1} parent=5 // pred_check
        %p166 = pneg %p165
      $region22: #{downsample_forward.1} parent=5 // pred_check_branch
        %168 = sbr.rel (%p166) target = $region24
      $region23: #{downsample_forward.1} parent=5 // pred_region
        // Predicated region
        $region25: #{downsample_forward.1} parent=23 // pred_check
          %p169 = pneg %p50
        $region26: #{downsample_forward.1} parent=23 // pred_check_branch
          %171 = sbr.rel (%p169) target = $region28
        $region27: #{downsample_forward.1} parent=23 // pred_region
          %s172 = sand.u32 %s40, 1
          %s173 = scalar_lea.sflag [#allocation3], %s172
          %s174 = sand.u32 %s40, 1
          %s175 = smul.addr %s174, 16
          %s176 = scalar_lea.vmem [#allocation2], %s175
          %s178 = ssub.s32 256, 256
          %179 = vsyncadd %s173, %s178
          %s180 = smul.addr %s24, 2
          %s181 = smul.addr %s23, 2
          %s182 = sadd.s32 %s180, %s181
          %s183 = smul.addr %s182, 128
          %s184 = scalar_lea.hbm %s0, %s183
          %s185 = sshll.u32 %s176, 4
          %s186 = int_to_ptr.vmem [resolvable:$true] %s185
          %191 = dma.hbm_to_vmem [thread:$0]  %s184, 256, %s186, %s173, 128, 128, 8
        $region28: #{downsample_forward.1} parent=23 // pred_fallthru
          _
      $region24: #{downsample_forward.1} parent=5 // pred_fallthru
        _
      %p192 = scmp.le.s32.totalorder 1, %s16
      %p193 = scmp.lt.s32.totalorder %s16, 3
      %p194 = pnand %p192, %p193
      %p195 = pneg %p194
      // Predicated region
      $region29: #{downsample_forward.1} parent=5 // pred_check
        _
      $region30: #{downsample_forward.1} parent=5 // pred_check_branch
        %197 = sbr.rel (%p194) target = $region32
      $region31: #{downsample_forward.1} parent=5 // pred_region
        %s198 = ssub.s32 %s16, 1
        %s199 = sand.u32 %s43, 1
        %s200 = scalar_lea.sflag [#allocation3], %s199
        %s201 = sand.u32 %s43, 1
        %s202 = smul.addr %s201, 16
        %s203 = scalar_lea.vmem [#allocation2], %s202
        // Predicated region
        $region33: #{downsample_forward.1} parent=31 // pred_check
          %p204 = pneg %p56
        $region34: #{downsample_forward.1} parent=31 // pred_check_branch
          %206 = sbr.rel (%p204) target = $region36
        $region35: #{downsample_forward.1} parent=31 // pred_region
          %207 = dma.done %s200, 256
        $region36: #{downsample_forward.1} parent=31 // pred_fallthru
          _
        // Predicated region
        $region37: #{downsample_forward.1} parent=31 // pred_check
          %p208 = pneg %p77
        $region38: #{downsample_forward.1} parent=31 // pred_check_branch
          %210 = sbr.rel (%p208) target = $region40
        $region39: #{downsample_forward.1} parent=31 // pred_region
          %211 = dma.done [#allocation6], 256
        $region40: #{downsample_forward.1} parent=31 // pred_fallthru
          _
        // Predicated region
        $region41: #{downsample_forward.1} parent=31 // pred_check
          %p212 = pneg %p98
        $region42: #{downsample_forward.1} parent=31 // pred_check_branch
          %214 = sbr.rel (%p212) target = $region44
        $region43: #{downsample_forward.1} parent=31 // pred_region
          %215 = dma.done [#allocation6], 64
        $region44: #{downsample_forward.1} parent=31 // pred_fallthru
          _
        %s216 = sand.u32 %s43, 1
        %s217 = scalar_lea.sflag [#allocation3], %s216
        %s218 = sand.u32 %s43, 1
        %s219 = smul.addr %s218, 16
        %s220 = scalar_lea.vmem [#allocation2], %s219
        %p221 = pneg %p56
        %p222 = pneg %p53
        %p223 = pneg %p77
        %p224 = pneg %p74
        %p225 = pneg %p98
        %p226 = pneg %p95
        %p227 = pneg %p126
        %p228 = pneg %p123
        %s229 = sand.u32 %s113, 1
        %s230 = scalar_lea.sflag [#allocation4], %s229
        %s231 = sand.u32 %s113, 1
        %s232 = smul.addr %s231, 4
        %s233 = scalar_lea.vmem [#allocation8], %s232
        %v234 = vld [vmem:[#allocation5] sm:$0xf]
        %v235 = vld [vmem:[%s203] sm:$0xff]
        %v236 = vld [vmem:[%s203 + $0x8] sm:$0xff]
        %s237 = scalar_lea.vmem [#allocation5], 4
        %v238 = vld [vmem:[%s237] sm:$0xf]
        %241 = vrot.lane.b32.xlu0 %v235, 127
        %v242 = vpop.permute.xlu0 %241
        %243 = vrot.lane.b32.xlu0 %v236, 127
        %v244 = vpop.permute.xlu0 %243
        %vm247 = vcmask 130048
        %v249 = vsel %vm247, %v238, 0
        %251 = vmatprep.subr.mxu0 0.0
        %252 = vmatpush1.msra.mxu0 %v242
        %253 = vmatprep.subr.mxu0 0.0
        %254 = vmatpush1.msra.mxu0 %v244
        %255 = vmatprep.subr.mxu0 0.0
        %256 = vmatpush1.msra.mxu0 0.0
        %257 = vmatprep.subr.mxu0 0.0
        %258 = vmatpush1.msra.mxu0 0.0
        %259 = vmatprep.subr.mxu0 0.0
        %260 = vmatpush1.msra.mxu0 0.0
        %261 = vmatprep.subr.mxu0 0.0
        %262 = vmatpush1.msra.mxu0 0.0
        %263 = vmatprep.subr.mxu0 0.0
        %264 = vmatpush1.msra.mxu0 0.0
        %265 = vmatprep.subr.mxu0 0.0
        %266 = vmatpush1.msra.mxu0 0.0
        %267 = vmatprep.subr.mxu0 0.0
        %268 = vmatpush1.msra.mxu0 0.0
        %269 = vmatprep.subr.mxu0 0.0
        %270 = vmatpush1.msra.mxu0 0.0
        %271 = vmatprep.subr.mxu0 0.0
        %272 = vmatpush1.msra.mxu0 0.0
        %273 = vmatprep.subr.mxu0 0.0
        %274 = vmatpush1.msra.mxu0 0.0
        %275 = vmatprep.subr.mxu0 0.0
        %276 = vmatpush1.msra.mxu0 0.0
        %277 = vmatprep.subr.mxu0 0.0
        %278 = vmatpush1.msra.mxu0 0.0
        %279 = vmatprep.subr.mxu0 0.0
        %280 = vmatpush1.msra.mxu0 0.0
        %281 = vmatprep.subr.mxu0 0.0
        %282 = vmatpush1.msra.mxu0 0.0
        %283 = vmatprep.subr.mxu0 0.0
        %284 = vmatpush1.msra.mxu0 0.0
        %285 = vmatprep.subr.mxu0 0.0
        %286 = vmatpush1.msra.mxu0 0.0
        %287 = vmatprep.subr.mxu0 0.0
        %288 = vmatpush1.msra.mxu0 0.0
        %289 = vmatprep.subr.mxu0 0.0
        %290 = vmatpush1.msra.mxu0 0.0
        %291 = vmatprep.subr.mxu0 0.0
        %292 = vmatpush1.msra.mxu0 0.0
        %293 = vmatprep.subr.mxu0 0.0
        %294 = vmatpush1.msra.mxu0 0.0
        %295 = vmatprep.subr.mxu0 0.0
        %296 = vmatpush1.msra.mxu0 0.0
        %297 = vmatprep.subr.mxu0 0.0
        %298 = vmatpush1.msra.mxu0 0.0
        %299 = vmatprep.subr.mxu0 0.0
        %300 = vmatpush1.msra.mxu0 0.0
        %301 = vmatprep.subr.mxu0 0.0
        %302 = vmatpush1.msra.mxu0 0.0
        %303 = vmatprep.subr.mxu0 0.0
        %304 = vmatpush1.msra.mxu0 0.0
        %305 = vmatprep.subr.mxu0 0.0
        %306 = vmatpush1.msra.mxu0 0.0
        %307 = vmatprep.subr.mxu0 0.0
        %308 = vmatpush1.msra.mxu0 0.0
        %309 = vmatprep.subr.mxu0 0.0
        %310 = vmatpush1.msra.mxu0 0.0
        %311 = vmatprep.subr.mxu0 0.0
        %312 = vmatpush1.msra.mxu0 0.0
        %313 = vmatprep.subr.mxu0 0.0
        %314 = vmatpush1.msra.mxu0 0.0
        %315 = vmatprep.mubr.f32.mxu0 0.0
        %316 = vmatmul.mubr.f32.gmra.mrb[0].mxu0 %v249
        %v317 = vpop.f32.mrb[0].mxu0
        %v318 = vadd.f32 0.0, %v317
        %v319 = vpop.f32.mrb[0].mxu0
        %320 = vdwg.mxu0
        %v322 = vsel %vm247, %v234, 0
        %324 = vmatprep.subr.mxu0 0.0
        %325 = vmatpush1.msra.mxu0 %v235
        %326 = vmatprep.subr.mxu0 0.0
        %327 = vmatpush1.msra.mxu0 %v236
        %328 = vmatprep.subr.mxu0 0.0
        %329 = vmatpush1.msra.mxu0 0.0
        %330 = vmatprep.subr.mxu0 0.0
        %331 = vmatpush1.msra.mxu0 0.0
        %332 = vmatprep.subr.mxu0 0.0
        %333 = vmatpush1.msra.mxu0 0.0
        %334 = vmatprep.subr.mxu0 0.0
        %335 = vmatpush1.msra.mxu0 0.0
        %336 = vmatprep.subr.mxu0 0.0
        %337 = vmatpush1.msra.mxu0 0.0
        %338 = vmatprep.subr.mxu0 0.0
        %339 = vmatpush1.msra.mxu0 0.0
        %340 = vmatprep.subr.mxu0 0.0
        %341 = vmatpush1.msra.mxu0 0.0
        %342 = vmatprep.subr.mxu0 0.0
        %343 = vmatpush1.msra.mxu0 0.0
        %344 = vmatprep.subr.mxu0 0.0
        %345 = vmatpush1.msra.mxu0 0.0
        %346 = vmatprep.subr.mxu0 0.0
        %347 = vmatpush1.msra.mxu0 0.0
        %348 = vmatprep.subr.mxu0 0.0
        %349 = vmatpush1.msra.mxu0 0.0
        %350 = vmatprep.subr.mxu0 0.0
        %351 = vmatpush1.msra.mxu0 0.0
        %352 = vmatprep.subr.mxu0 0.0
        %353 = vmatpush1.msra.mxu0 0.0
        %354 = vmatprep.subr.mxu0 0.0
        %355 = vmatpush1.msra.mxu0 0.0
        %356 = vmatprep.subr.mxu0 0.0
        %357 = vmatpush1.msra.mxu0 0.0
        %358 = vmatprep.subr.mxu0 0.0
        %359 = vmatpush1.msra.mxu0 0.0
        %360 = vmatprep.subr.mxu0 0.0
        %361 = vmatpush1.msra.mxu0 0.0
        %362 = vmatprep.subr.mxu0 0.0
        %363 = vmatpush1.msra.mxu0 0.0
        %364 = vmatprep.subr.mxu0 0.0
        %365 = vmatpush1.msra.mxu0 0.0
        %366 = vmatprep.subr.mxu0 0.0
        %367 = vmatpush1.msra.mxu0 0.0
        %368 = vmatprep.subr.mxu0 0.0
        %369 = vmatpush1.msra.mxu0 0.0
        %370 = vmatprep.subr.mxu0 0.0
        %371 = vmatpush1.msra.mxu0 0.0
        %372 = vmatprep.subr.mxu0 0.0
        %373 = vmatpush1.msra.mxu0 0.0
        %374 = vmatprep.subr.mxu0 0.0
        %375 = vmatpush1.msra.mxu0 0.0
        %376 = vmatprep.subr.mxu0 0.0
        %377 = vmatpush1.msra.mxu0 0.0
        %378 = vmatprep.subr.mxu0 0.0
        %379 = vmatpush1.msra.mxu0 0.0
        %380 = vmatprep.subr.mxu0 0.0
        %381 = vmatpush1.msra.mxu0 0.0
        %382 = vmatprep.subr.mxu0 0.0
        %383 = vmatpush1.msra.mxu0 0.0
        %384 = vmatprep.subr.mxu0 0.0
        %385 = vmatpush1.msra.mxu0 0.0
        %386 = vmatprep.subr.mxu0 0.0
        %387 = vmatpush1.msra.mxu0 0.0
        %388 = vmatprep.mubr.f32.mxu0 0.0
        %389 = vmatmul.mubr.f32.gmra.mrb[0].mxu0 %v322
        %v390 = vpop.f32.mrb[0].mxu0
        %v391 = vadd.f32 %v318, %v390
        %v392 = vpop.f32.mrb[0].mxu0
        %393 = vdwg.mxu0
        %s394 = scalar_lea.vmem [#allocation5], 8
        %v395 = vld [vmem:[%s394] sm:$0xf]
        %396 = vrot.lane.b32.xlu0 %v235, 119
        %v397 = vpop.permute.xlu0 %396
        %398 = vrot.lane.b32.xlu0 %v236, 119
        %v399 = vpop.permute.xlu0 %398
        %v403 = vsel %vm247, %v395, 0
        %405 = vmatprep.subr.mxu0 0.0
        %406 = vmatpush1.msra.mxu0 %v397
        %407 = vmatprep.subr.mxu0 0.0
        %408 = vmatpush1.msra.mxu0 %v399
        %409 = vmatprep.subr.mxu0 0.0
        %410 = vmatpush1.msra.mxu0 0.0
        %411 = vmatprep.subr.mxu0 0.0
        %412 = vmatpush1.msra.mxu0 0.0
        %413 = vmatprep.subr.mxu0 0.0
        %414 = vmatpush1.msra.mxu0 0.0
        %415 = vmatprep.subr.mxu0 0.0
        %416 = vmatpush1.msra.mxu0 0.0
        %417 = vmatprep.subr.mxu0 0.0
        %418 = vmatpush1.msra.mxu0 0.0
        %419 = vmatprep.subr.mxu0 0.0
        %420 = vmatpush1.msra.mxu0 0.0
        %421 = vmatprep.subr.mxu0 0.0
        %422 = vmatpush1.msra.mxu0 0.0
        %423 = vmatprep.subr.mxu0 0.0
        %424 = vmatpush1.msra.mxu0 0.0
        %425 = vmatprep.subr.mxu0 0.0
        %426 = vmatpush1.msra.mxu0 0.0
        %427 = vmatprep.subr.mxu0 0.0
        %428 = vmatpush1.msra.mxu0 0.0
        %429 = vmatprep.subr.mxu0 0.0
        %430 = vmatpush1.msra.mxu0 0.0
        %431 = vmatprep.subr.mxu0 0.0
        %432 = vmatpush1.msra.mxu0 0.0
        %433 = vmatprep.subr.mxu0 0.0
        %434 = vmatpush1.msra.mxu0 0.0
        %435 = vmatprep.subr.mxu0 0.0
        %436 = vmatpush1.msra.mxu0 0.0
        %437 = vmatprep.subr.mxu0 0.0
        %438 = vmatpush1.msra.mxu0 0.0
        %439 = vmatprep.subr.mxu0 0.0
        %440 = vmatpush1.msra.mxu0 0.0
        %441 = vmatprep.subr.mxu0 0.0
        %442 = vmatpush1.msra.mxu0 0.0
        %443 = vmatprep.subr.mxu0 0.0
        %444 = vmatpush1.msra.mxu0 0.0
        %445 = vmatprep.subr.mxu0 0.0
        %446 = vmatpush1.msra.mxu0 0.0
        %447 = vmatprep.subr.mxu0 0.0
        %448 = vmatpush1.msra.mxu0 0.0
        %449 = vmatprep.subr.mxu0 0.0
        %450 = vmatpush1.msra.mxu0 0.0
        %451 = vmatprep.subr.mxu0 0.0
        %452 = vmatpush1.msra.mxu0 0.0
        %453 = vmatprep.subr.mxu0 0.0
        %454 = vmatpush1.msra.mxu0 0.0
        %455 = vmatprep.subr.mxu0 0.0
        %456 = vmatpush1.msra.mxu0 0.0
        %457 = vmatprep.subr.mxu0 0.0
        %458 = vmatpush1.msra.mxu0 0.0
        %459 = vmatprep.subr.mxu0 0.0
        %460 = vmatpush1.msra.mxu0 0.0
        %461 = vmatprep.subr.mxu0 0.0
        %462 = vmatpush1.msra.mxu0 0.0
        %463 = vmatprep.subr.mxu0 0.0
        %464 = vmatpush1.msra.mxu0 0.0
        %465 = vmatprep.subr.mxu0 0.0
        %466 = vmatpush1.msra.mxu0 0.0
        %467 = vmatprep.subr.mxu0 0.0
        %468 = vmatpush1.msra.mxu0 0.0
        %469 = vmatprep.mubr.f32.mxu0 0.0
        %470 = vmatmul.mubr.f32.gmra.mrb[0].mxu0 %v403
        %v471 = vpop.f32.mrb[0].mxu0
        %v472 = vadd.f32 0.0, %v471
        %v473 = vpop.f32.mrb[0].mxu0
        %474 = vdwg.mxu0
        %v475 = vadd.f32 %v391, %v472
        %s476 = scalar_lea.vmem [#allocation5], 12
        %v477 = vld [vmem:[%s476] sm:$0xf]
        %478 = vrot.lane.b32.xlu0 %v235, 118
        %v479 = vpop.permute.xlu0 %478
        %480 = vrot.lane.b32.xlu0 %v236, 118
        %v481 = vpop.permute.xlu0 %480
        %v485 = vsel %vm247, %v477, 0
        %487 = vmatprep.subr.mxu0 0.0
        %488 = vmatpush1.msra.mxu0 %v479
        %489 = vmatprep.subr.mxu0 0.0
        %490 = vmatpush1.msra.mxu0 %v481
        %491 = vmatprep.subr.mxu0 0.0
        %492 = vmatpush1.msra.mxu0 0.0
        %493 = vmatprep.subr.mxu0 0.0
        %494 = vmatpush1.msra.mxu0 0.0
        %495 = vmatprep.subr.mxu0 0.0
        %496 = vmatpush1.msra.mxu0 0.0
        %497 = vmatprep.subr.mxu0 0.0
        %498 = vmatpush1.msra.mxu0 0.0
        %499 = vmatprep.subr.mxu0 0.0
        %500 = vmatpush1.msra.mxu0 0.0
        %501 = vmatprep.subr.mxu0 0.0
        %502 = vmatpush1.msra.mxu0 0.0
        %503 = vmatprep.subr.mxu0 0.0
        %504 = vmatpush1.msra.mxu0 0.0
        %505 = vmatprep.subr.mxu0 0.0
        %506 = vmatpush1.msra.mxu0 0.0
        %507 = vmatprep.subr.mxu0 0.0
        %508 = vmatpush1.msra.mxu0 0.0
        %509 = vmatprep.subr.mxu0 0.0
        %510 = vmatpush1.msra.mxu0 0.0
        %511 = vmatprep.subr.mxu0 0.0
        %512 = vmatpush1.msra.mxu0 0.0
        %513 = vmatprep.subr.mxu0 0.0
        %514 = vmatpush1.msra.mxu0 0.0
        %515 = vmatprep.subr.mxu0 0.0
        %516 = vmatpush1.msra.mxu0 0.0
        %517 = vmatprep.subr.mxu0 0.0
        %518 = vmatpush1.msra.mxu0 0.0
        %519 = vmatprep.subr.mxu0 0.0
        %520 = vmatpush1.msra.mxu0 0.0
        %521 = vmatprep.subr.mxu0 0.0
        %522 = vmatpush1.msra.mxu0 0.0
        %523 = vmatprep.subr.mxu0 0.0
        %524 = vmatpush1.msra.mxu0 0.0
        %525 = vmatprep.subr.mxu0 0.0
        %526 = vmatpush1.msra.mxu0 0.0
        %527 = vmatprep.subr.mxu0 0.0
        %528 = vmatpush1.msra.mxu0 0.0
        %529 = vmatprep.subr.mxu0 0.0
        %530 = vmatpush1.msra.mxu0 0.0
        %531 = vmatprep.subr.mxu0 0.0
        %532 = vmatpush1.msra.mxu0 0.0
        %533 = vmatprep.subr.mxu0 0.0
        %534 = vmatpush1.msra.mxu0 0.0
        %535 = vmatprep.subr.mxu0 0.0
        %536 = vmatpush1.msra.mxu0 0.0
        %537 = vmatprep.subr.mxu0 0.0
        %538 = vmatpush1.msra.mxu0 0.0
        %539 = vmatprep.subr.mxu0 0.0
        %540 = vmatpush1.msra.mxu0 0.0
        %541 = vmatprep.subr.mxu0 0.0
        %542 = vmatpush1.msra.mxu0 0.0
        %543 = vmatprep.subr.mxu0 0.0
        %544 = vmatpush1.msra.mxu0 0.0
        %545 = vmatprep.subr.mxu0 0.0
        %546 = vmatpush1.msra.mxu0 0.0
        %547 = vmatprep.subr.mxu0 0.0
        %548 = vmatpush1.msra.mxu0 0.0
        %549 = vmatprep.subr.mxu0 0.0
        %550 = vmatpush1.msra.mxu0 0.0
        %551 = vmatprep.mubr.f32.mxu0 0.0
        %552 = vmatmul.mubr.f32.gmra.mrb[0].mxu0 %v485
        %v553 = vpop.f32.mrb[0].mxu0
        %v554 = vadd.f32 0.0, %v553
        %v555 = vpop.f32.mrb[0].mxu0
        %556 = vdwg.mxu0
        %v557 = vadd.f32 %v475, %v554
        %v558 = vld [vmem:[#allocation7] sm:$0xf]
        %560 = vset.pattern.permute.xlu0 0
        %561 = vperm.xlu0 %560, %v558
        %v562 = vpop.permute.xlu0 %561
        %v564 = vadd.f32 %v557, %v562
        %vm565 = vcmask 584704
        %566 = vst.msk [vmem:[%s233] sm:$0xf] %vm565, %v564
        %s567 = sand.u32 %s113, 1
        %s568 = scalar_lea.sflag [#allocation4], %s567
        %s569 = sand.u32 %s113, 1
        %s570 = smul.addr %s569, 4
        %s571 = scalar_lea.vmem [#allocation8], %s570
        // Predicated region
        $region45: #{downsample_forward.1} parent=31 // pred_check
          %p572 = pneg %p123
        $region46: #{downsample_forward.1} parent=31 // pred_check_branch
          %574 = sbr.rel (%p572) target = $region48
        $region47: #{downsample_forward.1} parent=31 // pred_region
          %s576 = ssub.s32 64, 64
          %577 = vsyncadd %s568, %s576
          %s578 = sadd.s32 %s26, %s25
          %s579 = smul.addr %s578, 64
          %s580 = scalar_lea.hbm %s3, %s579
          %s582 = sshll.u32 %s571, 4
          %s583 = int_to_ptr.vmem [resolvable:$true] %s582
          %585 = dma.vmem_to_hbm [thread:$0]  %s583, 64, %s580, %s568
        $region48: #{downsample_forward.1} parent=31 // pred_fallthru
          _
      $region32: #{downsample_forward.1} parent=5 // pred_fallthru
        _
      %p586 = scmp.le.s32.totalorder 2, %s16
      // Predicated region
      $region49: #{downsample_forward.1} parent=5 // pred_check
        %p587 = pneg %p586
      $region50: #{downsample_forward.1} parent=5 // pred_check_branch
        %589 = sbr.rel (%p587) target = $region52
      $region51: #{downsample_forward.1} parent=5 // pred_region
        %s590 = ssub.s32 %s16, 2
        // Predicated region
        $region53: #{downsample_forward.1} parent=51 // pred_check
          %p591 = pneg %p129
        $region54: #{downsample_forward.1} parent=51 // pred_check_branch
          %593 = sbr.rel (%p591) target = $region56
        $region55: #{downsample_forward.1} parent=51 // pred_region
          %s594 = sand.u32 %s114, 1
          %s595 = scalar_lea.sflag [#allocation4], %s594
          %s596 = sand.u32 %s114, 1
          %s597 = smul.addr %s596, 4
          %s598 = scalar_lea.vmem [#allocation8], %s597
          %599 = dma.done %s595, 64
        $region56: #{downsample_forward.1} parent=51 // pred_fallthru
          _
      $region52: #{downsample_forward.1} parent=5 // pred_fallthru
        _
    $region6: #{downsample_forward.1} parent=1 // loop_footer
      %s20 = sadd.s32 1, %s16
    $region7: #{downsample_forward.1} parent=1 // loop_footer_branch
      %15 = sbr.rel target = $region3
    $region8: #{downsample_forward.1} parent=1 // loop_exit
      _
    %600 = vsyncpa [#allocation3], 1
    %s601 = scalar_lea.sflag [#allocation3], 1
    %602 = vsyncpa %s601, 1
    %603 = vsyncpa [#allocation6], 1
    %604 = vsyncpa [#allocation4], 1
    %s605 = scalar_lea.sflag [#allocation4], 1
    %606 = vsyncpa %s605, 1

</llo_original>
